<compile_context>
chip_gen: v7x
topology: tpu7x:2x2x1
jax: 0.10.0
libtpu: 0.0.40
codegen_flags: <defaults>
</compile_context>

<pallas_src>
import functools

import numpy as np
import jax
import jax.numpy as jnp
from jax import lax
from jax.experimental import pallas as pl
from jax.experimental.pallas import tpu as pltpu


_VMEM_SPEC = pl.BlockSpec(memory_space=pltpu.MemorySpace.VMEM)


# ---------------------------------------------------------------------------
# Fused Pallas kernel: conv1 + sigmoid + conv2 + sigmoid + avgpool + linear
# ---------------------------------------------------------------------------
def _fused_convnet_kernel(p1_ref, w1_ref, b1_ref, rsel_ref, a2_ref, b2_ref,
                          prow_ref, wfc_ref, bfc_ref, o_ref):
    # ---- conv1 (im2col matmul, block-diag weight) + bias + sigmoid ---------
    # p1: (B*oh1, ow1*k*k*Cin) @ w1blk: (ow1*k*k*Cin, ow1*C1) -> (B*oh1, ow1*C1)
    y1 = jnp.dot(p1_ref[...], w1_ref[...], preferred_element_type=jnp.float32)
    y1 = jax.nn.sigmoid(y1 + b1_ref[...])

    # ---- conv2 as a sum over the k kernel-ROW offsets -----------------------
    # rsel[kh] (B*oh2, B*oh1): 0/1 row gather (zero padding) of the conv1 rows
    #                          feeding kernel-row offset kh.
    # a2[kh]   (ow1*C1, ow2*C2): column gather + zero padding + sum over kw +
    #                          C1->C2 channel mixing folded into one operand.
    # Doing the gathers as MXU matmuls keeps everything 2-D and resident in
    # VMEM/vregs (no strided slices, no reshapes).
    nkh = rsel_ref.shape[0]
    acc = jnp.zeros((rsel_ref.shape[1], a2_ref.shape[2]), jnp.float32)
    for kh in range(nkh):                      # static unrolled loop (k = 4)
        rows = jnp.dot(rsel_ref[kh], y1,
                       preferred_element_type=jnp.float32)      # (B*oh2, ow1*C1)
        acc = acc + jnp.dot(rows, a2_ref[kh],
                            preferred_element_type=jnp.float32)  # (B*oh2, ow2*C2)
    y2 = jax.nn.sigmoid(acc + b2_ref[...])

    # ---- global average pool + linear ---------------------------------------
    # prow averages over output rows per batch; the column/channel average is
    # pre-folded (with its 1/ow2 scale) into wfc_ref.
    pooled = jnp.dot(prow_ref[...], y2,
                     preferred_element_type=jnp.float32)         # (B, ow2*C2)
    out = jnp.dot(pooled, wfc_ref[...], preferred_element_type=jnp.float32)
    o_ref[...] = (out + bfc_ref[...]).astype(o_ref.dtype)


# ---------------------------------------------------------------------------
# Wrapper-side constant construction (trace-time / tiny XLA ops)
# ---------------------------------------------------------------------------
def _im2col(x_nhwc, k, s, p):
    B, H, W, C = x_nhwc.shape
    oh = (H + 2 * p - k) // s + 1
    ow = (W + 2 * p - k) // s + 1
    xp = jnp.pad(x_nhwc, ((0, 0), (p, p), (p, p), (0, 0)))
    cols = []
    for kh in range(k):
        for kw in range(k):
            cols.append(xp[:, kh:kh + s * oh:s, kw:kw + s * ow:s, :])
    # column ordering: (kh * k + kw) * C + c  (matches the weight reshape)
    patches = jnp.concatenate(cols, axis=-1)           # (B, oh, ow, k*k*C)
    return patches, oh, ow


def _row_select_mats(B, ih, oh, k, s, p):
    """R[kh][b*oh+io, b*ih+ii] = 1 iff ii == s*io + kh - p (zero padding)."""
    R = np.zeros((k, B * oh, B * ih), np.float32)
    for kh in range(k):
        for io in range(oh):
            ii = s * io + kh - p
            if 0 <= ii < ih:
                for b in range(B):
                    R[kh, b * oh + io, b * ih + ii] = 1.0
    return R


def _col_select_mats(iw, ow, k, s, p):
    """S[kw][ji, jo] = 1 iff ji == s*jo + kw - p (zero padding)."""
    S = np.zeros((k, iw, ow), np.float32)
    for kw in range(k):
        for jo in range(ow):
            ji = s * jo + kw - p
            if 0 <= ji < iw:
                S[kw, ji, jo] = 1.0
    return S


# ---------------------------------------------------------------------------
# Forward pass (matches ConvNet.forward semantics, use_swish=False)
# ---------------------------------------------------------------------------
@functools.partial(jax.jit, static_argnames=("kernel_size", "stride", "padding"))
def convnet_forward(x_nchw, params, *, kernel_size=4, stride=2, padding=1):
    k, s, p = kernel_size, stride, padding
    B, cin, H, W = x_nchw.shape
    c1 = params["w1"].shape[0]
    c2 = params["w2"].shape[0]
    ncls = params["wfc"].shape[1]

    x = jnp.transpose(x_nchw, (0, 2, 3, 1))                     # NCHW -> NHWC
    patches, oh1, ow1 = _im2col(x, k, s, p)                     # (B,oh1,ow1,kkCin)
    kkcin = k * k * cin
    p1 = patches.reshape(B * oh1, ow1 * kkcin)                  # (B*oh1, ow1*kkCin)

    # conv1 weight: (C1, Cin, KH, KW) -> (KH*KW*Cin, C1), block-diag over ow1
    # so the conv1 matmul emits the (B*oh1, ow1*C1) layout directly.
    w1mat = jnp.transpose(params["w1"], (2, 3, 1, 0)).reshape(kkcin, c1)
    w1blk = jnp.einsum("jJ,ec->jeJc", jnp.eye(ow1, dtype=w1mat.dtype), w1mat)
    w1blk = w1blk.reshape(ow1 * kkcin, ow1 * c1)
    b1t = jnp.tile(params["b1"], ow1).reshape(1, ow1 * c1)

    oh2 = (oh1 + 2 * p - k) // s + 1
    ow2 = (ow1 + 2 * p - k) // s + 1

    # Factorized conv2 gather: tiny row selectors + combined col-gather/weight.
    rsel = jnp.asarray(_row_select_mats(B, oh1, oh2, k, s, p))  # (k, B*oh2, B*oh1)
    csel = jnp.asarray(_col_select_mats(ow1, ow2, k, s, p))     # (k, ow1, ow2)
    w2t = jnp.transpose(params["w2"], (2, 3, 1, 0))             # (k, k, C1, C2)
    # a2[kh][(ji*C1+c), (jo*C2+c2)] = w2[c2, c, kh, kw=ji-s*jo+p] (else 0).
    a2 = jnp.einsum("wij,hwcd->hicjd", csel, w2t,
                    precision=lax.Precision.HIGHEST)
    a2 = a2.reshape(k, ow1 * c1, ow2 * c2)
    b2t = jnp.tile(params["b2"], ow2).reshape(1, ow2 * c2)

    # Row-average (1/oh2) per batch; column/channel average (1/ow2) folded
    # into the classifier weight.
    prow = jnp.asarray(np.kron(np.eye(B, dtype=np.float32),
                               np.full((1, oh2), 1.0 / oh2, np.float32)))
    wfc_fold = jnp.einsum("j,cn->jcn",
                          jnp.full((ow2,), 1.0 / ow2, params["wfc"].dtype),
                          params["wfc"]).reshape(ow2 * c2, ncls)
    bfc = params["bfc"].reshape(1, ncls)

    return pl.pallas_call(
        _fused_convnet_kernel,
        out_shape=jax.ShapeDtypeStruct((B, ncls), jnp.float32),
        in_specs=[_VMEM_SPEC] * 9,
        out_specs=_VMEM_SPEC,
    )(p1, w1blk, b1t, rsel, a2, b2t, prow, wfc_fold, bfc)


# Pure-JAX reference (for correctness check only)
def convnet_reference(x_nchw, params):
    y = x_nchw
    for w, b in ((params["w1"], params["b1"]), (params["w2"], params["b2"])):
        y = lax.conv_general_dilated(
            y, w, window_strides=(2, 2), padding=((1, 1), (1, 1)),
            dimension_numbers=("NCHW", "OIHW", "NCHW"))
        y = jax.nn.sigmoid(y + b[None, :, None, None])
    pooled = jnp.mean(y, axis=(2, 3))
    return pooled @ params["wfc"] + params["bfc"]


# ---------------------------------------------------------------------------
# Deterministic parameter init + run
# ---------------------------------------------------------------------------
def init_params(key, in_ch=1, conv_channels=(8, 16), num_classes=10, k=4):
    ks = jax.random.split(key, 6)
    c0, c1, c2 = in_ch, conv_channels[0], conv_channels[1]
    return {
        "w1": 0.1 * jax.random.normal(ks[0], (c1, c0, k, k), jnp.float32),
        "b1": 0.1 * jax.random.normal(ks[1], (c1,), jnp.float32),
        "w2": 0.1 * jax.random.normal(ks[2], (c2, c1, k, k), jnp.float32),
        "b2": 0.1 * jax.random.normal(ks[3], (c2,), jnp.float32),
        "wfc": 0.1 * jax.random.normal(ks[4], (c2, num_classes), jnp.float32),
        "bfc": 0.1 * jax.random.normal(ks[5], (num_classes,), jnp.float32),
    }


if __name__ == "__main__":
    key = jax.random.PRNGKey(0)
    k_x, k_p = jax.random.split(key)

    # Small shapes consistent with the module: image_shape=(1, 16, 16),
    # conv_channels=[8, 16], num_classes=10, kernel=4, stride=2, padding=1.
    B, C_IN, H, W = 2, 1, 16, 16
    x = jax.random.normal(k_x, (B, C_IN, H, W), jnp.float32)
    params = init_params(k_p, in_ch=C_IN, conv_channels=(8, 16), num_classes=10)

    out = jax.block_until_ready(convnet_forward(x, params))
    assert out.shape == (B, 10), out.shape

    ref = jax.block_until_ready(convnet_reference(x, params))
    assert jnp.allclose(out, ref, atol=1e-4, rtol=1e-4), (
        f"max abs err {jnp.max(jnp.abs(out - ref))}")

    print("KERNEL_OK")
</pallas_src>

<mosaic_0001>
module attributes {stable_mosaic.version = 11 : i64} {
  func.func @_fused_convnet_kernel(%arg0: memref<16x128xf32, #tpu.memory_space<vmem>>, %arg1: memref<128x64xf32, #tpu.memory_space<vmem>>, %arg2: memref<1x64xf32, #tpu.memory_space<vmem>>, %arg3: memref<4x8x16xf32, #tpu.memory_space<vmem>>, %arg4: memref<4x64x64xf32, #tpu.memory_space<vmem>>, %arg5: memref<1x64xf32, #tpu.memory_space<vmem>>, %arg6: memref<2x8xf32, #tpu.memory_space<vmem>>, %arg7: memref<64x10xf32, #tpu.memory_space<vmem>>, %arg8: memref<1x10xf32, #tpu.memory_space<vmem>>, %arg9: memref<2x10xf32, #tpu.memory_space<vmem>>) attributes {dimension_semantics = [], scalar_prefetch = 0 : i64, scratch_operands = 0 : i64, tpu.core_type = #tpu.core_type<tc>} {
    %c0 = arith.constant 0 : index
    %c0_0 = arith.constant 0 : index
    %0 = vector.load %arg0[%c0, %c0_0] : memref<16x128xf32, #tpu.memory_space<vmem>>, vector<16x128xf32>
    %c0_1 = arith.constant 0 : index
    %c0_2 = arith.constant 0 : index
    %1 = vector.load %arg1[%c0_1, %c0_2] : memref<128x64xf32, #tpu.memory_space<vmem>>, vector<128x64xf32>
    %cst = arith.constant dense<0.000000e+00> : vector<16x64xf32>
    %2 = tpu.matmul %0, %1, %cst {dimension_numbers = #tpu.dot_dimension_numbers<[1], [0], [0], [1], [0, 0, 1, 1], [], []>} : vector<16x128xf32>, vector<128x64xf32>, vector<16x64xf32> -> vector<16x64xf32>
    %c0_3 = arith.constant 0 : index
    %c0_4 = arith.constant 0 : index
    %3 = vector.load %arg2[%c0_3, %c0_4] : memref<1x64xf32, #tpu.memory_space<vmem>>, vector<1x64xf32>
    %4 = vector.broadcast %3 : vector<1x64xf32> to vector<16x64xf32>
    %5 = arith.addf %2, %4 : vector<16x64xf32>
    %6 = arith.negf %5 : vector<16x64xf32>
    %7 = math.exp %6 : vector<16x64xf32>
    %cst_5 = arith.constant 1.000000e+00 : f32
    %8 = vector.broadcast %cst_5 : f32 to vector<16x64xf32>
    %9 = arith.addf %8, %7 : vector<16x64xf32>
    %10 = arith.divf %8, %9 : vector<16x64xf32>
    %cst_6 = arith.constant 0.000000e+00 : f32
    %11 = vector.broadcast %cst_6 : f32 to vector<8x64xf32>
    %c0_7 = arith.constant 0 : index
    %c0_8 = arith.constant 0 : index
    %c0_9 = arith.constant 0 : index
    %12 = vector.load %arg3[%c0_7, %c0_8, %c0_9] : memref<4x8x16xf32, #tpu.memory_space<vmem>>, vector<1x8x16xf32>
    %13 = vector.shape_cast %12 : vector<1x8x16xf32> to vector<8x16xf32>
    %cst_10 = arith.constant dense<0.000000e+00> : vector<8x64xf32>
    %14 = tpu.matmul %13, %10, %cst_10 {dimension_numbers = #tpu.dot_dimension_numbers<[1], [0], [0], [1], [0, 0, 1, 1], [], []>} : vector<8x16xf32>, vector<16x64xf32>, vector<8x64xf32> -> vector<8x64xf32>
    %c0_11 = arith.constant 0 : index
    %c0_12 = arith.constant 0 : index
    %c0_13 = arith.constant 0 : index
    %15 = vector.load %arg4[%c0_11, %c0_12, %c0_13] : memref<4x64x64xf32, #tpu.memory_space<vmem>>, vector<1x64x64xf32>
    %16 = vector.shape_cast %15 : vector<1x64x64xf32> to vector<64x64xf32>
    %cst_14 = arith.constant dense<0.000000e+00> : vector<8x64xf32>
    %17 = tpu.matmul %14, %16, %cst_14 {dimension_numbers = #tpu.dot_dimension_numbers<[1], [0], [0], [1], [0, 0, 1, 1], [], []>} : vector<8x64xf32>, vector<64x64xf32>, vector<8x64xf32> -> vector<8x64xf32>
    %18 = arith.addf %11, %17 : vector<8x64xf32>
    %c1 = arith.constant 1 : index
    %c0_15 = arith.constant 0 : index
    %c0_16 = arith.constant 0 : index
    %19 = vector.load %arg3[%c1, %c0_15, %c0_16] : memref<4x8x16xf32, #tpu.memory_space<vmem>>, vector<1x8x16xf32>
    %20 = vector.shape_cast %19 : vector<1x8x16xf32> to vector<8x16xf32>
    %cst_17 = arith.constant dense<0.000000e+00> : vector<8x64xf32>
    %21 = tpu.matmul %20, %10, %cst_17 {dimension_numbers = #tpu.dot_dimension_numbers<[1], [0], [0], [1], [0, 0, 1, 1], [], []>} : vector<8x16xf32>, vector<16x64xf32>, vector<8x64xf32> -> vector<8x64xf32>
    %c1_18 = arith.constant 1 : index
    %c0_19 = arith.constant 0 : index
    %c0_20 = arith.constant 0 : index
    %22 = vector.load %arg4[%c1_18, %c0_19, %c0_20] : memref<4x64x64xf32, #tpu.memory_space<vmem>>, vector<1x64x64xf32>
    %23 = vector.shape_cast %22 : vector<1x64x64xf32> to vector<64x64xf32>
    %cst_21 = arith.constant dense<0.000000e+00> : vector<8x64xf32>
    %24 = tpu.matmul %21, %23, %cst_21 {dimension_numbers = #tpu.dot_dimension_numbers<[1], [0], [0], [1], [0, 0, 1, 1], [], []>} : vector<8x64xf32>, vector<64x64xf32>, vector<8x64xf32> -> vector<8x64xf32>
    %25 = arith.addf %18, %24 : vector<8x64xf32>
    %c2 = arith.constant 2 : index
    %c0_22 = arith.constant 0 : index
    %c0_23 = arith.constant 0 : index
    %26 = vector.load %arg3[%c2, %c0_22, %c0_23] : memref<4x8x16xf32, #tpu.memory_space<vmem>>, vector<1x8x16xf32>
    %27 = vector.shape_cast %26 : vector<1x8x16xf32> to vector<8x16xf32>
    %cst_24 = arith.constant dense<0.000000e+00> : vector<8x64xf32>
    %28 = tpu.matmul %27, %10, %cst_24 {dimension_numbers = #tpu.dot_dimension_numbers<[1], [0], [0], [1], [0, 0, 1, 1], [], []>} : vector<8x16xf32>, vector<16x64xf32>, vector<8x64xf32> -> vector<8x64xf32>
    %c2_25 = arith.constant 2 : index
    %c0_26 = arith.constant 0 : index
    %c0_27 = arith.constant 0 : index
    %29 = vector.load %arg4[%c2_25, %c0_26, %c0_27] : memref<4x64x64xf32, #tpu.memory_space<vmem>>, vector<1x64x64xf32>
    %30 = vector.shape_cast %29 : vector<1x64x64xf32> to vector<64x64xf32>
    %cst_28 = arith.constant dense<0.000000e+00> : vector<8x64xf32>
    %31 = tpu.matmul %28, %30, %cst_28 {dimension_numbers = #tpu.dot_dimension_numbers<[1], [0], [0], [1], [0, 0, 1, 1], [], []>} : vector<8x64xf32>, vector<64x64xf32>, vector<8x64xf32> -> vector<8x64xf32>
    %32 = arith.addf %25, %31 : vector<8x64xf32>
    %c3 = arith.constant 3 : index
    %c0_29 = arith.constant 0 : index
    %c0_30 = arith.constant 0 : index
    %33 = vector.load %arg3[%c3, %c0_29, %c0_30] : memref<4x8x16xf32, #tpu.memory_space<vmem>>, vector<1x8x16xf32>
    %34 = vector.shape_cast %33 : vector<1x8x16xf32> to vector<8x16xf32>
    %cst_31 = arith.constant dense<0.000000e+00> : vector<8x64xf32>
    %35 = tpu.matmul %34, %10, %cst_31 {dimension_numbers = #tpu.dot_dimension_numbers<[1], [0], [0], [1], [0, 0, 1, 1], [], []>} : vector<8x16xf32>, vector<16x64xf32>, vector<8x64xf32> -> vector<8x64xf32>
    %c3_32 = arith.constant 3 : index
    %c0_33 = arith.constant 0 : index
    %c0_34 = arith.constant 0 : index
    %36 = vector.load %arg4[%c3_32, %c0_33, %c0_34] : memref<4x64x64xf32, #tpu.memory_space<vmem>>, vector<1x64x64xf32>
    %37 = vector.shape_cast %36 : vector<1x64x64xf32> to vector<64x64xf32>
    %cst_35 = arith.constant dense<0.000000e+00> : vector<8x64xf32>
    %38 = tpu.matmul %35, %37, %cst_35 {dimension_numbers = #tpu.dot_dimension_numbers<[1], [0], [0], [1], [0, 0, 1, 1], [], []>} : vector<8x64xf32>, vector<64x64xf32>, vector<8x64xf32> -> vector<8x64xf32>
    %39 = arith.addf %32, %38 : vector<8x64xf32>
    %c0_36 = arith.constant 0 : index
    %c0_37 = arith.constant 0 : index
    %40 = vector.load %arg5[%c0_36, %c0_37] : memref<1x64xf32, #tpu.memory_space<vmem>>, vector<1x64xf32>
    %41 = vector.broadcast %40 : vector<1x64xf32> to vector<8x64xf32>
    %42 = arith.addf %39, %41 : vector<8x64xf32>
    %43 = arith.negf %42 : vector<8x64xf32>
    %44 = math.exp %43 : vector<8x64xf32>
    %cst_38 = arith.constant 1.000000e+00 : f32
    %45 = vector.broadcast %cst_38 : f32 to vector<8x64xf32>
    %46 = arith.addf %45, %44 : vector<8x64xf32>
    %47 = arith.divf %45, %46 : vector<8x64xf32>
    %c0_39 = arith.constant 0 : index
    %c0_40 = arith.constant 0 : index
    %48 = vector.load %arg6[%c0_39, %c0_40] : memref<2x8xf32, #tpu.memory_space<vmem>>, vector<2x8xf32>
    %cst_41 = arith.constant dense<0.000000e+00> : vector<2x64xf32>
    %49 = tpu.matmul %48, %47, %cst_41 {dimension_numbers = #tpu.dot_dimension_numbers<[1], [0], [0], [1], [0, 0, 1, 1], [], []>} : vector<2x8xf32>, vector<8x64xf32>, vector<2x64xf32> -> vector<2x64xf32>
    %c0_42 = arith.constant 0 : index
    %c0_43 = arith.constant 0 : index
    %50 = vector.load %arg7[%c0_42, %c0_43] : memref<64x10xf32, #tpu.memory_space<vmem>>, vector<64x10xf32>
    %cst_44 = arith.constant dense<0.000000e+00> : vector<2x10xf32>
    %51 = tpu.matmul %49, %50, %cst_44 {dimension_numbers = #tpu.dot_dimension_numbers<[1], [0], [0], [1], [0, 0, 1, 1], [], []>} : vector<2x64xf32>, vector<64x10xf32>, vector<2x10xf32> -> vector<2x10xf32>
    %c0_45 = arith.constant 0 : index
    %c0_46 = arith.constant 0 : index
    %52 = vector.load %arg8[%c0_45, %c0_46] : memref<1x10xf32, #tpu.memory_space<vmem>>, vector<1x10xf32>
    %53 = vector.broadcast %52 : vector<1x10xf32> to vector<2x10xf32>
    %54 = arith.addf %51, %53 : vector<2x10xf32>
    %c0_47 = arith.constant 0 : index
    %c0_48 = arith.constant 0 : index
    %55 = vector.load %arg9[%c0_47, %c0_48] : memref<2x10xf32, #tpu.memory_space<vmem>>, vector<2x10xf32>
    tpu.vector_store %arg9[%c0_47, %c0_48], %54 {strides = array<i32>} : memref<2x10xf32, #tpu.memory_space<vmem>>, vector<2x10xf32>,
    return
  }
}

</mosaic_0001>

<llo_original>
// kernel: tile.13
$region0: #{tile.13}
  #allocation0 [shape = 's32[1]{0}', space=sflag, size = 0x4, scoped, tag = 'scoped memory for tile.13']
  %s0 = inlined_call_operand.vmem [shape: f32[8], index: 0, kind: input, shape index: {}]
  %s1 = inlined_call_operand.vmem [shape: f32[8,8], index: 1, kind: output, shape index: {}]
  // Predicated region
  $region2: #{tile.13} parent=0 // pred_check
    _
  $region3: #{tile.13} parent=0 // pred_check_branch
    %3 = sbr.rel (0) target = $region5
  $region4: #{tile.13} parent=0 // pred_region
    _
  $region5: #{tile.13} parent=0 // pred_fallthru
    _
  %v4 = vld [vmem:[%s0] ss:$0 sm:$0xff]
  %5 = vst [vmem:[%s1] sm:$0xff] %v4

// kernel: tile.14
$region0: #{tile.14}
  %s0 = inlined_call_operand.vmem [shape: f32[8,8], index: 0, kind: input, shape index: {}]
  %s1 = inlined_call_operand.vmem [shape: f32[1,64], index: 1, kind: output, shape index: {}]
  $region1: #{tile.14} parent=0
    #allocation0 [shape = 'u8[4096]{0}', space=vmem, size = 0x1000, scoped, tag = 'scoped mem for output reshape']
    %v2 = vld [vmem:[%s0] sm:$0x1]
    %vm3 = vcmask 64512
    %4 = vst.msk [vmem:[#allocation0] sm:$0x1] %vm3, %v2
    %s5 = scalar_lea.vmem %s0, 7
    %v6 = vld [vmem:[%s5] sm:$0x1]
    %7 = vrot.lane.b32.xlu0 %v6, 56
    %v8 = vpop.permute.xlu0 %7
    %vm9 = vcmask 523712
    %10 = vst.msk [vmem:[#allocation0] sm:$0x1] %vm9, %v8
    %s11 = scalar_lea.vmem %s0, 6
    %v12 = vld [vmem:[%s11] sm:$0x1]
    %13 = vrot.lane.b32.xlu0 %v12, 48
    %v14 = vpop.permute.xlu0 %13
    %vm15 = vcmask 458112
    %16 = vst.msk [vmem:[#allocation0] sm:$0x1] %vm15, %v14
    %s17 = scalar_lea.vmem %s0, 5
    %v18 = vld [vmem:[%s17] sm:$0x1]
    %19 = vrot.lane.b32.xlu0 %v18, 40
    %v20 = vpop.permute.xlu0 %19
    %vm21 = vcmask 392512
    %22 = vst.msk [vmem:[#allocation0] sm:$0x1] %vm21, %v20
    %s23 = scalar_lea.vmem %s0, 4
    %v24 = vld [vmem:[%s23] sm:$0x1]
    %25 = vrot.lane.b32.xlu0 %v24, 32
    %v26 = vpop.permute.xlu0 %25
    %vm27 = vcmask 326912
    %28 = vst.msk [vmem:[#allocation0] sm:$0x1] %vm27, %v26
    %s29 = scalar_lea.vmem %s0, 3
    %v30 = vld [vmem:[%s29] sm:$0x1]
    %31 = vrot.lane.b32.xlu0 %v30, 24
    %v32 = vpop.permute.xlu0 %31
    %vm33 = vcmask 261312
    %34 = vst.msk [vmem:[#allocation0] sm:$0x1] %vm33, %v32
    %s35 = scalar_lea.vmem %s0, 2
    %v36 = vld [vmem:[%s35] sm:$0x1]
    %37 = vrot.lane.b32.xlu0 %v36, 16
    %v38 = vpop.permute.xlu0 %37
    %vm39 = vcmask 195712
    %40 = vst.msk [vmem:[#allocation0] sm:$0x1] %vm39, %v38
    %s41 = scalar_lea.vmem %s0, 1
    %v42 = vld [vmem:[%s41] sm:$0x1]
    %43 = vrot.lane.b32.xlu0 %v42, 8
    %v44 = vpop.permute.xlu0 %43
    %vm45 = vcmask 130112
    %46 = vst.msk [vmem:[#allocation0] sm:$0x1] %vm45, %v44
    %s48 = sshllo.u32 0, 1
    %v50 = vld [vmem:[#allocation0] sm:%s48]
    %s51 = sshllo.u32 0, 1
    %52 = vst [vmem:[%s1] sm:%s51] %v50

// kernel: tile.18
$region0: #{tile.18}
  #allocation0 [shape = 's32[1]{0}', space=sflag, size = 0x4, scoped, tag = 'scoped memory for tile.18']
  %s0 = inlined_call_operand.vmem [shape: f32[16], index: 0, kind: input, shape index: {}]
  %s1 = inlined_call_operand.vmem [shape: f32[4,16], index: 1, kind: output, shape index: {}]
  // Predicated region
  $region2: #{tile.18} parent=0 // pred_check
    _
  $region3: #{tile.18} parent=0 // pred_check_branch
    %3 = sbr.rel (0) target = $region5
  $region4: #{tile.18} parent=0 // pred_region
    _
  $region5: #{tile.18} parent=0 // pred_fallthru
    _
  %v4 = vld [vmem:[%s0] ss:$0 sm:$0xff]
  %5 = vst [vmem:[%s1] sm:$0xf] %v4

// kernel: tile.19
$region0: #{tile.19}
  %s0 = inlined_call_operand.vmem [shape: f32[4,16], index: 0, kind: input, shape index: {}]
  %s1 = inlined_call_operand.vmem [shape: f32[1,64], index: 1, kind: output, shape index: {}]
  $region1: #{tile.19} parent=0
    #allocation0 [shape = 'u8[4096]{0}', space=vmem, size = 0x1000, scoped, tag = 'scoped mem for output reshape']
    #allocation1 [shape = 'u8[4096]{0}', space=vmem, size = 0x1000, scoped, tag = 'scoped mem for input reshape']
    %s3 = sshllo.u32 0, 4
    %v4 = vld [vmem:[%s0] sm:%s3]
    %5 = vst [vmem:[#allocation1] sm:%s3] %v4
    %v6 = vld [vmem:[#allocation1] sm:$0x1]
    %vm7 = vcmask 130048
    %8 = vst.msk [vmem:[#allocation0] sm:$0x1] %vm7, %v6
    %s9 = scalar_lea.vmem [#allocation1], 3
    %v10 = vld [vmem:[%s9] sm:$0x1]
    %11 = vrot.lane.b32.xlu0 %v10, 48
    %v12 = vpop.permute.xlu0 %11
    %vm13 = vcmask 523648
    %14 = vst.msk [vmem:[#allocation0] sm:$0x1] %vm13, %v12
    %s15 = scalar_lea.vmem [#allocation1], 2
    %v16 = vld [vmem:[%s15] sm:$0x1]
    %17 = vrot.lane.b32.xlu0 %v16, 32
    %v18 = vpop.permute.xlu0 %17
    %vm19 = vcmask 392448
    %20 = vst.msk [vmem:[#allocation0] sm:$0x1] %vm19, %v18
    %s21 = scalar_lea.vmem [#allocation1], 1
    %v22 = vld [vmem:[%s21] sm:$0x1]
    %23 = vrot.lane.b32.xlu0 %v22, 16
    %v24 = vpop.permute.xlu0 %23
    %vm25 = vcmask 261248
    %26 = vst.msk [vmem:[#allocation0] sm:$0x1] %vm25, %v24
    %s28 = sshllo.u32 0, 1
    %v30 = vld [vmem:[#allocation0] sm:%s28]
    %s31 = sshllo.u32 0, 1
    %32 = vst [vmem:[%s1] sm:%s31] %v30

// kernel: convnet_forward.1
$region0: #{convnet_forward.1}
  #allocation0 [shape = 'u32[]', space=smem, size = 0x4, offset = 0x4, fixed_abs, tag = 'smem constant byte address 0x4 - core index']
  #allocation1 [shape = 'u32[144,128]{1,0:T(1,128)}', space=vmem, size = 0x12000, scoped, tag = 'internal scratch']
  %s0 = inlined_call_operand.vmem [shape: f32[16,128], index: 0, kind: input, shape index: {}]
  %s1 = inlined_call_operand.vmem [shape: f32[128,64], index: 1, kind: input, shape index: {}]
  %s2 = inlined_call_operand.vmem [shape: f32[1,64], index: 2, kind: input, shape index: {}]
  %s3 = inlined_call_operand.vmem [shape: f32[4,8,16], index: 3, kind: input, shape index: {}]
  %s4 = inlined_call_operand.vmem [shape: f32[4,64,64], index: 4, kind: input, shape index: {}]
  %s5 = inlined_call_operand.vmem [shape: f32[1,64], index: 5, kind: input, shape index: {}]
  %s6 = inlined_call_operand.vmem [shape: f32[2,8], index: 6, kind: input, shape index: {}]
  %s7 = inlined_call_operand.vmem [shape: f32[64,10], index: 7, kind: input, shape index: {}]
  %s8 = inlined_call_operand.vmem [shape: f32[1,10], index: 8, kind: input, shape index: {}]
  %s9 = inlined_call_operand.hbm [shape: f32[2,10], index: 9, kind: output, shape index: {}]
  %s10 = sld [smem:[#allocation0]]
  $region46: #{convnet_forward.1} parent=0
    _
  %s12 = ssub.s32 1, %s10
  %s13 = scalar_select 0, %s12, %s10
  $region1: #{convnet_forward.1} parent=0
    #allocation2 [shape = 'u8[1024]{0}', space=vmem, size = 0x400, scoped, tag = 'output window, operand 0, single buffered']
    #allocation3 [shape = 's32[1]{0}', space=sflag, size = 0x4, scoped, tag = 'scoped memory for convnet_forward.1']
    %14 = vsyncpa [#allocation3], 0
    // Predicated region
    $region2: #{convnet_forward.1} parent=1 // pred_check
      _
    $region3: #{convnet_forward.1} parent=1 // pred_check_branch
      %16 = sbr.rel (0) target = $region5
    $region4: #{convnet_forward.1} parent=1 // pred_region
      _
    $region5: #{convnet_forward.1} parent=1 // pred_fallthru
      _
    // Predicated region
    $region6: #{convnet_forward.1} parent=1 // pred_check
      _
    $region7: #{convnet_forward.1} parent=1 // pred_check_branch
      %18 = sbr.rel (0) target = $region9
    $region8: #{convnet_forward.1} parent=1 // pred_region
      _
    $region9: #{convnet_forward.1} parent=1 // pred_fallthru
      _
    // Predicated region
    $region10: #{convnet_forward.1} parent=1 // pred_check
      _
    $region11: #{convnet_forward.1} parent=1 // pred_check_branch
      %20 = sbr.rel (0) target = $region13
    $region12: #{convnet_forward.1} parent=1 // pred_region
      _
    $region13: #{convnet_forward.1} parent=1 // pred_fallthru
      _
    // Predicated region
    $region14: #{convnet_forward.1} parent=1 // pred_check
      _
    $region15: #{convnet_forward.1} parent=1 // pred_check_branch
      %22 = sbr.rel (0) target = $region17
    $region16: #{convnet_forward.1} parent=1 // pred_region
      _
    $region17: #{convnet_forward.1} parent=1 // pred_fallthru
      _
    // Predicated region
    $region18: #{convnet_forward.1} parent=1 // pred_check
      _
    $region19: #{convnet_forward.1} parent=1 // pred_check_branch
      %24 = sbr.rel (0) target = $region21
    $region20: #{convnet_forward.1} parent=1 // pred_region
      _
    $region21: #{convnet_forward.1} parent=1 // pred_fallthru
      _
    // Predicated region
    $region22: #{convnet_forward.1} parent=1 // pred_check
      _
    $region23: #{convnet_forward.1} parent=1 // pred_check_branch
      %26 = sbr.rel (0) target = $region25
    $region24: #{convnet_forward.1} parent=1 // pred_region
      _
    $region25: #{convnet_forward.1} parent=1 // pred_fallthru
      _
    // Predicated region
    $region26: #{convnet_forward.1} parent=1 // pred_check
      _
    $region27: #{convnet_forward.1} parent=1 // pred_check_branch
      %28 = sbr.rel (0) target = $region29
    $region28: #{convnet_forward.1} parent=1 // pred_region
      _
    $region29: #{convnet_forward.1} parent=1 // pred_fallthru
      _
    // Predicated region
    $region30: #{convnet_forward.1} parent=1 // pred_check
      _
    $region31: #{convnet_forward.1} parent=1 // pred_check_branch
      %30 = sbr.rel (0) target = $region33
    $region32: #{convnet_forward.1} parent=1 // pred_region
      _
    $region33: #{convnet_forward.1} parent=1 // pred_fallthru
      _
    // Predicated region
    $region34: #{convnet_forward.1} parent=1 // pred_check
      _
    $region35: #{convnet_forward.1} parent=1 // pred_check_branch
      %32 = sbr.rel (0) target = $region37
    $region36: #{convnet_forward.1} parent=1 // pred_region
      _
    $region37: #{convnet_forward.1} parent=1 // pred_fallthru
      _
    %v33 = vld [vmem:[%s0] sm:$0xff]
    %v34 = vld [vmem:[%s0 + $0x8] sm:$0xff]
    %v35 = vld [vmem:[%s1] sm:$0xff]
    %v36 = vld [vmem:[%s1 + $0x8] sm:$0xff]
    %v37 = vld [vmem:[%s1 + $0x10] sm:$0xff]
    %v38 = vld [vmem:[%s1 + $0x18] sm:$0xff]
    %v39 = vld [vmem:[%s1 + $0x20] sm:$0xff]
    %v40 = vld [vmem:[%s1 + $0x28] sm:$0xff]
    %v41 = vld [vmem:[%s1 + $0x30] sm:$0xff]
    %v42 = vld [vmem:[%s1 + $0x38] sm:$0xff]
    %v43 = vld [vmem:[%s1 + $0x40] sm:$0xff]
    %v44 = vld [vmem:[%s1 + $0x48] sm:$0xff]
    %v45 = vld [vmem:[%s1 + $0x50] sm:$0xff]
    %v46 = vld [vmem:[%s1 + $0x58] sm:$0xff]
    %v47 = vld [vmem:[%s1 + $0x60] sm:$0xff]
    %v48 = vld [vmem:[%s1 + $0x68] sm:$0xff]
    %v49 = vld [vmem:[%s1 + $0x70] sm:$0xff]
    %v50 = vld [vmem:[%s1 + $0x78] sm:$0xff]
    %v51 = vld [vmem:[%s2] sm:$0x1]
    %v53 = vlaneseq
    %v54 = vshrl.u32 %v53, 7
    %v55 = vsub.s32 0, %v54
    %v56 = vrot.slane %v51, %v55
    %58 = vmatprep.subr.mxu0 0.0
    %59 = vmatpush1.msra.mxu0 %v35
    %60 = vmatprep.subr.mxu0 0.0
    %61 = vmatpush1.msra.mxu0 %v36
    %62 = vmatprep.subr.mxu0 0.0
    %63 = vmatpush1.msra.mxu0 %v37
    %64 = vmatprep.subr.mxu0 0.0
    %65 = vmatpush1.msra.mxu0 %v38
    %66 = vmatprep.subr.mxu0 0.0
    %67 = vmatpush1.msra.mxu0 %v39
    %68 = vmatprep.subr.mxu0 0.0
    %69 = vmatpush1.msra.mxu0 %v40
    %70 = vmatprep.subr.mxu0 0.0
    %71 = vmatpush1.msra.mxu0 %v41
    %72 = vmatprep.subr.mxu0 0.0
    %73 = vmatpush1.msra.mxu0 %v42
    %74 = vmatprep.subr.mxu0 0.0
    %75 = vmatpush1.msra.mxu0 %v43
    %76 = vmatprep.subr.mxu0 0.0
    %77 = vmatpush1.msra.mxu0 %v44
    %78 = vmatprep.subr.mxu0 0.0
    %79 = vmatpush1.msra.mxu0 %v45
    %80 = vmatprep.subr.mxu0 0.0
    %81 = vmatpush1.msra.mxu0 %v46
    %82 = vmatprep.subr.mxu0 0.0
    %83 = vmatpush1.msra.mxu0 %v47
    %84 = vmatprep.subr.mxu0 0.0
    %85 = vmatpush1.msra.mxu0 %v48
    %86 = vmatprep.subr.mxu0 0.0
    %87 = vmatpush1.msra.mxu0 %v49
    %88 = vmatprep.subr.mxu0 0.0
    %89 = vmatpush1.msra.mxu0 %v50
    %90 = vmatprep.subr.mxu0 0.0
    %91 = vmatpush1.msra.mxu0 0.0
    %92 = vmatprep.subr.mxu0 0.0
    %93 = vmatpush1.msra.mxu0 0.0
    %94 = vmatprep.subr.mxu0 0.0
    %95 = vmatpush1.msra.mxu0 0.0
    %96 = vmatprep.subr.mxu0 0.0
    %97 = vmatpush1.msra.mxu0 0.0
    %98 = vmatprep.subr.mxu0 0.0
    %99 = vmatpush1.msra.mxu0 0.0
    %100 = vmatprep.subr.mxu0 0.0
    %101 = vmatpush1.msra.mxu0 0.0
    %102 = vmatprep.subr.mxu0 0.0
    %103 = vmatpush1.msra.mxu0 0.0
    %104 = vmatprep.subr.mxu0 0.0
    %105 = vmatpush1.msra.mxu0 0.0
    %106 = vmatprep.subr.mxu0 0.0
    %107 = vmatpush1.msra.mxu0 0.0
    %108 = vmatprep.subr.mxu0 0.0
    %109 = vmatpush1.msra.mxu0 0.0
    %110 = vmatprep.subr.mxu0 0.0
    %111 = vmatpush1.msra.mxu0 0.0
    %112 = vmatprep.subr.mxu0 0.0
    %113 = vmatpush1.msra.mxu0 0.0
    %114 = vmatprep.subr.mxu0 0.0
    %115 = vmatpush1.msra.mxu0 0.0
    %116 = vmatprep.subr.mxu0 0.0
    %117 = vmatpush1.msra.mxu0 0.0
    %118 = vmatprep.subr.mxu0 0.0
    %119 = vmatpush1.msra.mxu0 0.0
    %120 = vmatprep.subr.mxu0 0.0
    %121 = vmatpush1.msra.mxu0 0.0
    %122 = vmatprep.mubr.f32.mxu0 0.0
    %123 = vmatmul.mubr.f32.gmra.mrb[0].mxu0 %v33
    %v124 = vpop.f32.mrb[0].mxu0
    %v125 = vadd.f32 %v56, %v124
    %v126 = vpop.f32.mrb[0].mxu0
    %127 = vmatprep.mubr.f32.mxu0 0.0
    %128 = vmatmul.mubr.f32.gmra.mrb[0].mxu0 %v34
    %v129 = vpop.f32.mrb[0].mxu0
    %v130 = vadd.f32 %v56, %v129
    %v131 = vpop.f32.mrb[0].mxu0
    %132 = vdwg.mxu0
    %v133 = vxor.u32 %v125, 2147483648
    %v134 = vxor.u32 %v130, 2147483648
    %v135 = vmul.f32 %v133, 1.442695
    %v136 = vpow.pop %v135
    %v137 = vmul.f32 %v134, 1.442695
    %v138 = vpow.pop %v137
    %v139 = vadd.f32 %v136, 1.0
    %v140 = vadd.f32 %v138, 1.0
    %v141 = vrcp.pop %v139
    %v142 = vmul.f32 1.0, %v141
    %v143 = vrcp.pop %v140
    %v144 = vmul.f32 1.0, %v143
    %v145 = vld [vmem:[%s3] sm:$0xff]
    %vm146 = vcmask 130048
    %v148 = vsel %vm146, %v145, 0
    %150 = vmatprep.subr.mxu0 0.0
    %151 = vmatpush1.msra.mxu0 %v142
    %152 = vmatprep.subr.mxu0 0.0
    %153 = vmatpush1.msra.mxu0 %v144
    %154 = vmatprep.subr.mxu0 0.0
    %155 = vmatpush1.msra.mxu0 0.0
    %156 = vmatprep.subr.mxu0 0.0
    %157 = vmatpush1.msra.mxu0 0.0
    %158 = vmatprep.subr.mxu0 0.0
    %159 = vmatpush1.msra.mxu0 0.0
    %160 = vmatprep.subr.mxu0 0.0
    %161 = vmatpush1.msra.mxu0 0.0
    %162 = vmatprep.subr.mxu0 0.0
    %163 = vmatpush1.msra.mxu0 0.0
    %164 = vmatprep.subr.mxu0 0.0
    %165 = vmatpush1.msra.mxu0 0.0
    %166 = vmatprep.subr.mxu0 0.0
    %167 = vmatpush1.msra.mxu0 0.0
    %168 = vmatprep.subr.mxu0 0.0
    %169 = vmatpush1.msra.mxu0 0.0
    %170 = vmatprep.subr.mxu0 0.0
    %171 = vmatpush1.msra.mxu0 0.0
    %172 = vmatprep.subr.mxu0 0.0
    %173 = vmatpush1.msra.mxu0 0.0
    %174 = vmatprep.subr.mxu0 0.0
    %175 = vmatpush1.msra.mxu0 0.0
    %176 = vmatprep.subr.mxu0 0.0
    %177 = vmatpush1.msra.mxu0 0.0
    %178 = vmatprep.subr.mxu0 0.0
    %179 = vmatpush1.msra.mxu0 0.0
    %180 = vmatprep.subr.mxu0 0.0
    %181 = vmatpush1.msra.mxu0 0.0
    %182 = vmatprep.subr.mxu0 0.0
    %183 = vmatpush1.msra.mxu0 0.0
    %184 = vmatprep.subr.mxu0 0.0
    %185 = vmatpush1.msra.mxu0 0.0
    %186 = vmatprep.subr.mxu0 0.0
    %187 = vmatpush1.msra.mxu0 0.0
    %188 = vmatprep.subr.mxu0 0.0
    %189 = vmatpush1.msra.mxu0 0.0
    %190 = vmatprep.subr.mxu0 0.0
    %191 = vmatpush1.msra.mxu0 0.0
    %192 = vmatprep.subr.mxu0 0.0
    %193 = vmatpush1.msra.mxu0 0.0
    %194 = vmatprep.subr.mxu0 0.0
    %195 = vmatpush1.msra.mxu0 0.0
    %196 = vmatprep.subr.mxu0 0.0
    %197 = vmatpush1.msra.mxu0 0.0
    %198 = vmatprep.subr.mxu0 0.0
    %199 = vmatpush1.msra.mxu0 0.0
    %200 = vmatprep.subr.mxu0 0.0
    %201 = vmatpush1.msra.mxu0 0.0
    %202 = vmatprep.subr.mxu0 0.0
    %203 = vmatpush1.msra.mxu0 0.0
    %204 = vmatprep.subr.mxu0 0.0
    %205 = vmatpush1.msra.mxu0 0.0
    %206 = vmatprep.subr.mxu0 0.0
    %207 = vmatpush1.msra.mxu0 0.0
    %208 = vmatprep.subr.mxu0 0.0
    %209 = vmatpush1.msra.mxu0 0.0
    %210 = vmatprep.subr.mxu0 0.0
    %211 = vmatpush1.msra.mxu0 0.0
    %212 = vmatprep.subr.mxu0 0.0
    %213 = vmatpush1.msra.mxu0 0.0
    %214 = vmatprep.mubr.f32.mxu0 0.0
    %215 = vmatmul.mubr.f32.gmra.mrb[0].mxu0 %v148
    %v216 = vpop.f32.mrb[0].mxu0
    %v217 = vadd.f32 0.0, %v216
    %v218 = vpop.f32.mrb[0].mxu0
    %219 = vdwg.mxu0
    %v220 = vld [vmem:[%s4] sm:$0xff]
    %v221 = vld [vmem:[%s4 + $0x8] sm:$0xff]
    %v222 = vld [vmem:[%s4 + $0x10] sm:$0xff]
    %v223 = vld [vmem:[%s4 + $0x18] sm:$0xff]
    %v224 = vld [vmem:[%s4 + $0x20] sm:$0xff]
    %v225 = vld [vmem:[%s4 + $0x28] sm:$0xff]
    %v226 = vld [vmem:[%s4 + $0x30] sm:$0xff]
    %v227 = vld [vmem:[%s4 + $0x38] sm:$0xff]
    %s228 = scalar_lea.vmem %s3, 8
    %v229 = vld [vmem:[%s228] sm:$0xff]
    %v231 = vsel %vm146, %v229, 0
    %233 = vmatprep.subr.mxu0 0.0
    %234 = vmatpush1.msra.mxu0 %v142
    %235 = vmatprep.subr.mxu0 0.0
    %236 = vmatpush1.msra.mxu0 %v144
    %237 = vmatprep.subr.mxu0 0.0
    %238 = vmatpush1.msra.mxu0 0.0
    %239 = vmatprep.subr.mxu0 0.0
    %240 = vmatpush1.msra.mxu0 0.0
    %241 = vmatprep.subr.mxu0 0.0
    %242 = vmatpush1.msra.mxu0 0.0
    %243 = vmatprep.subr.mxu0 0.0
    %244 = vmatpush1.msra.mxu0 0.0
    %245 = vmatprep.subr.mxu0 0.0
    %246 = vmatpush1.msra.mxu0 0.0
    %247 = vmatprep.subr.mxu0 0.0
    %248 = vmatpush1.msra.mxu0 0.0
    %249 = vmatprep.subr.mxu0 0.0
    %250 = vmatpush1.msra.mxu0 0.0
    %251 = vmatprep.subr.mxu0 0.0
    %252 = vmatpush1.msra.mxu0 0.0
    %253 = vmatprep.subr.mxu0 0.0
    %254 = vmatpush1.msra.mxu0 0.0
    %255 = vmatprep.subr.mxu0 0.0
    %256 = vmatpush1.msra.mxu0 0.0
    %257 = vmatprep.subr.mxu0 0.0
    %258 = vmatpush1.msra.mxu0 0.0
    %259 = vmatprep.subr.mxu0 0.0
    %260 = vmatpush1.msra.mxu0 0.0
    %261 = vmatprep.subr.mxu0 0.0
    %262 = vmatpush1.msra.mxu0 0.0
    %263 = vmatprep.subr.mxu0 0.0
    %264 = vmatpush1.msra.mxu0 0.0
    %265 = vmatprep.subr.mxu0 0.0
    %266 = vmatpush1.msra.mxu0 0.0
    %267 = vmatprep.subr.mxu0 0.0
    %268 = vmatpush1.msra.mxu0 0.0
    %269 = vmatprep.subr.mxu0 0.0
    %270 = vmatpush1.msra.mxu0 0.0
    %271 = vmatprep.subr.mxu0 0.0
    %272 = vmatpush1.msra.mxu0 0.0
    %273 = vmatprep.subr.mxu0 0.0
    %274 = vmatpush1.msra.mxu0 0.0
    %275 = vmatprep.subr.mxu0 0.0
    %276 = vmatpush1.msra.mxu0 0.0
    %277 = vmatprep.subr.mxu0 0.0
    %278 = vmatpush1.msra.mxu0 0.0
    %279 = vmatprep.subr.mxu0 0.0
    %280 = vmatpush1.msra.mxu0 0.0
    %281 = vmatprep.subr.mxu0 0.0
    %282 = vmatpush1.msra.mxu0 0.0
    %283 = vmatprep.subr.mxu0 0.0
    %284 = vmatpush1.msra.mxu0 0.0
    %285 = vmatprep.subr.mxu0 0.0
    %286 = vmatpush1.msra.mxu0 0.0
    %287 = vmatprep.subr.mxu0 0.0
    %288 = vmatpush1.msra.mxu0 0.0
    %289 = vmatprep.subr.mxu0 0.0
    %290 = vmatpush1.msra.mxu0 0.0
    %291 = vmatprep.subr.mxu0 0.0
    %292 = vmatpush1.msra.mxu0 0.0
    %293 = vmatprep.subr.mxu0 0.0
    %294 = vmatpush1.msra.mxu0 0.0
    %295 = vmatprep.subr.mxu0 0.0
    %296 = vmatpush1.msra.mxu0 0.0
    %297 = vmatprep.mubr.f32.mxu0 0.0
    %298 = vmatmul.mubr.f32.gmra.mrb[0].mxu0 %v231
    %v299 = vpop.f32.mrb[0].mxu0
    %v300 = vadd.f32 0.0, %v299
    %v301 = vpop.f32.mrb[0].mxu0
    %302 = vdwg.mxu0
    %s303 = scalar_lea.vmem %s4, 64
    %v304 = vld [vmem:[%s303] sm:$0xff]
    %v305 = vld [vmem:[%s303 + $0x8] sm:$0xff]
    %v306 = vld [vmem:[%s303 + $0x10] sm:$0xff]
    %v307 = vld [vmem:[%s303 + $0x18] sm:$0xff]
    %v308 = vld [vmem:[%s303 + $0x20] sm:$0xff]
    %v309 = vld [vmem:[%s303 + $0x28] sm:$0xff]
    %v310 = vld [vmem:[%s303 + $0x30] sm:$0xff]
    %v311 = vld [vmem:[%s303 + $0x38] sm:$0xff]
    %vm312 = vcmask 523264
    %v314 = vsel %vm312, %v300, 0
    %316 = vmatprep.subr.mxu0 0.0
    %317 = vmatpush1.msra.mxu0 %v304
    %318 = vmatprep.subr.mxu0 0.0
    %319 = vmatpush1.msra.mxu0 %v305
    %320 = vmatprep.subr.mxu0 0.0
    %321 = vmatpush1.msra.mxu0 %v306
    %322 = vmatprep.subr.mxu0 0.0
    %323 = vmatpush1.msra.mxu0 %v307
    %324 = vmatprep.subr.mxu0 0.0
    %325 = vmatpush1.msra.mxu0 %v308
    %326 = vmatprep.subr.mxu0 0.0
    %327 = vmatpush1.msra.mxu0 %v309
    %328 = vmatprep.subr.mxu0 0.0
    %329 = vmatpush1.msra.mxu0 %v310
    %330 = vmatprep.subr.mxu0 0.0
    %331 = vmatpush1.msra.mxu0 %v311
    %332 = vmatprep.subr.mxu0 0.0
    %333 = vmatpush1.msra.mxu0 0.0
    %334 = vmatprep.subr.mxu0 0.0
    %335 = vmatpush1.msra.mxu0 0.0
    %336 = vmatprep.subr.mxu0 0.0
    %337 = vmatpush1.msra.mxu0 0.0
    %338 = vmatprep.subr.mxu0 0.0
    %339 = vmatpush1.msra.mxu0 0.0
    %340 = vmatprep.subr.mxu0 0.0
    %341 = vmatpush1.msra.mxu0 0.0
    %342 = vmatprep.subr.mxu0 0.0
    %343 = vmatpush1.msra.mxu0 0.0
    %344 = vmatprep.subr.mxu0 0.0
    %345 = vmatpush1.msra.mxu0 0.0
    %346 = vmatprep.subr.mxu0 0.0
    %347 = vmatpush1.msra.mxu0 0.0
    %348 = vmatprep.subr.mxu0 0.0
    %349 = vmatpush1.msra.mxu0 0.0
    %350 = vmatprep.subr.mxu0 0.0
    %351 = vmatpush1.msra.mxu0 0.0
    %352 = vmatprep.subr.mxu0 0.0
    %353 = vmatpush1.msra.mxu0 0.0
    %354 = vmatprep.subr.mxu0 0.0
    %355 = vmatpush1.msra.mxu0 0.0
    %356 = vmatprep.subr.mxu0 0.0
    %357 = vmatpush1.msra.mxu0 0.0
    %358 = vmatprep.subr.mxu0 0.0
    %359 = vmatpush1.msra.mxu0 0.0
    %360 = vmatprep.subr.mxu0 0.0
    %361 = vmatpush1.msra.mxu0 0.0
    %362 = vmatprep.subr.mxu0 0.0
    %363 = vmatpush1.msra.mxu0 0.0
    %364 = vmatprep.subr.mxu0 0.0
    %365 = vmatpush1.msra.mxu0 0.0
    %366 = vmatprep.subr.mxu0 0.0
    %367 = vmatpush1.msra.mxu0 0.0
    %368 = vmatprep.subr.mxu0 0.0
    %369 = vmatpush1.msra.mxu0 0.0
    %370 = vmatprep.subr.mxu0 0.0
    %371 = vmatpush1.msra.mxu0 0.0
    %372 = vmatprep.subr.mxu0 0.0
    %373 = vmatpush1.msra.mxu0 0.0
    %374 = vmatprep.subr.mxu0 0.0
    %375 = vmatpush1.msra.mxu0 0.0
    %376 = vmatprep.subr.mxu0 0.0
    %377 = vmatpush1.msra.mxu0 0.0
    %378 = vmatprep.subr.mxu0 0.0
    %379 = vmatpush1.msra.mxu0 0.0
    %380 = vmatprep.mubr.f32.mxu0 0.0
    %381 = vmatmul.mubr.f32.gmra.mrb[0].mxu0 %v314
    %v382 = vpop.f32.mrb[0].mxu0
    %v383 = vadd.f32 0.0, %v382
    %v384 = vpop.f32.mrb[0].mxu0
    %385 = vdwg.mxu0
    %v387 = vsel %vm312, %v217, 0
    %389 = vmatprep.subr.mxu0 0.0
    %390 = vmatpush1.msra.mxu0 %v220
    %391 = vmatprep.subr.mxu0 0.0
    %392 = vmatpush1.msra.mxu0 %v221
    %393 = vmatprep.subr.mxu0 0.0
    %394 = vmatpush1.msra.mxu0 %v222
    %395 = vmatprep.subr.mxu0 0.0
    %396 = vmatpush1.msra.mxu0 %v223
    %397 = vmatprep.subr.mxu0 0.0
    %398 = vmatpush1.msra.mxu0 %v224
    %399 = vmatprep.subr.mxu0 0.0
    %400 = vmatpush1.msra.mxu0 %v225
    %401 = vmatprep.subr.mxu0 0.0
    %402 = vmatpush1.msra.mxu0 %v226
    %403 = vmatprep.subr.mxu0 0.0
    %404 = vmatpush1.msra.mxu0 %v227
    %405 = vmatprep.subr.mxu0 0.0
    %406 = vmatpush1.msra.mxu0 0.0
    %407 = vmatprep.subr.mxu0 0.0
    %408 = vmatpush1.msra.mxu0 0.0
    %409 = vmatprep.subr.mxu0 0.0
    %410 = vmatpush1.msra.mxu0 0.0
    %411 = vmatprep.subr.mxu0 0.0
    %412 = vmatpush1.msra.mxu0 0.0
    %413 = vmatprep.subr.mxu0 0.0
    %414 = vmatpush1.msra.mxu0 0.0
    %415 = vmatprep.subr.mxu0 0.0
    %416 = vmatpush1.msra.mxu0 0.0
    %417 = vmatprep.subr.mxu0 0.0
    %418 = vmatpush1.msra.mxu0 0.0
    %419 = vmatprep.subr.mxu0 0.0
    %420 = vmatpush1.msra.mxu0 0.0
    %421 = vmatprep.subr.mxu0 0.0
    %422 = vmatpush1.msra.mxu0 0.0
    %423 = vmatprep.subr.mxu0 0.0
    %424 = vmatpush1.msra.mxu0 0.0
    %425 = vmatprep.subr.mxu0 0.0
    %426 = vmatpush1.msra.mxu0 0.0
    %427 = vmatprep.subr.mxu0 0.0
    %428 = vmatpush1.msra.mxu0 0.0
    %429 = vmatprep.subr.mxu0 0.0
    %430 = vmatpush1.msra.mxu0 0.0
    %431 = vmatprep.subr.mxu0 0.0
    %432 = vmatpush1.msra.mxu0 0.0
    %433 = vmatprep.subr.mxu0 0.0
    %434 = vmatpush1.msra.mxu0 0.0
    %435 = vmatprep.subr.mxu0 0.0
    %436 = vmatpush1.msra.mxu0 0.0
    %437 = vmatprep.subr.mxu0 0.0
    %438 = vmatpush1.msra.mxu0 0.0
    %439 = vmatprep.subr.mxu0 0.0
    %440 = vmatpush1.msra.mxu0 0.0
    %441 = vmatprep.subr.mxu0 0.0
    %442 = vmatpush1.msra.mxu0 0.0
    %443 = vmatprep.subr.mxu0 0.0
    %444 = vmatpush1.msra.mxu0 0.0
    %445 = vmatprep.subr.mxu0 0.0
    %446 = vmatpush1.msra.mxu0 0.0
    %447 = vmatprep.subr.mxu0 0.0
    %448 = vmatpush1.msra.mxu0 0.0
    %449 = vmatprep.subr.mxu0 0.0
    %450 = vmatpush1.msra.mxu0 0.0
    %451 = vmatprep.subr.mxu0 0.0
    %452 = vmatpush1.msra.mxu0 0.0
    %453 = vmatprep.mubr.f32.mxu0 0.0
    %454 = vmatmul.mubr.f32.gmra.mrb[0].mxu0 %v387
    %v455 = vpop.f32.mrb[0].mxu0
    %v456 = vadd.f32 %v383, %v455
    %v457 = vpop.f32.mrb[0].mxu0
    %458 = vdwg.mxu0
    %s459 = scalar_lea.vmem %s3, 16
    %v460 = vld [vmem:[%s459] sm:$0xff]
    %v462 = vsel %vm146, %v460, 0
    %464 = vmatprep.subr.mxu0 0.0
    %465 = vmatpush1.msra.mxu0 %v142
    %466 = vmatprep.subr.mxu0 0.0
    %467 = vmatpush1.msra.mxu0 %v144
    %468 = vmatprep.subr.mxu0 0.0
    %469 = vmatpush1.msra.mxu0 0.0
    %470 = vmatprep.subr.mxu0 0.0
    %471 = vmatpush1.msra.mxu0 0.0
    %472 = vmatprep.subr.mxu0 0.0
    %473 = vmatpush1.msra.mxu0 0.0
    %474 = vmatprep.subr.mxu0 0.0
    %475 = vmatpush1.msra.mxu0 0.0
    %476 = vmatprep.subr.mxu0 0.0
    %477 = vmatpush1.msra.mxu0 0.0
    %478 = vmatprep.subr.mxu0 0.0
    %479 = vmatpush1.msra.mxu0 0.0
    %480 = vmatprep.subr.mxu0 0.0
    %481 = vmatpush1.msra.mxu0 0.0
    %482 = vmatprep.subr.mxu0 0.0
    %483 = vmatpush1.msra.mxu0 0.0
    %484 = vmatprep.subr.mxu0 0.0
    %485 = vmatpush1.msra.mxu0 0.0
    %486 = vmatprep.subr.mxu0 0.0
    %487 = vmatpush1.msra.mxu0 0.0
    %488 = vmatprep.subr.mxu0 0.0
    %489 = vmatpush1.msra.mxu0 0.0
    %490 = vmatprep.subr.mxu0 0.0
    %491 = vmatpush1.msra.mxu0 0.0
    %492 = vmatprep.subr.mxu0 0.0
    %493 = vmatpush1.msra.mxu0 0.0
    %494 = vmatprep.subr.mxu0 0.0
    %495 = vmatpush1.msra.mxu0 0.0
    %496 = vmatprep.subr.mxu0 0.0
    %497 = vmatpush1.msra.mxu0 0.0
    %498 = vmatprep.subr.mxu0 0.0
    %499 = vmatpush1.msra.mxu0 0.0
    %500 = vmatprep.subr.mxu0 0.0
    %501 = vmatpush1.msra.mxu0 0.0
    %502 = vmatprep.subr.mxu0 0.0
    %503 = vmatpush1.msra.mxu0 0.0
    %504 = vmatprep.subr.mxu0 0.0
    %505 = vmatpush1.msra.mxu0 0.0
    %506 = vmatprep.subr.mxu0 0.0
    %507 = vmatpush1.msra.mxu0 0.0
    %508 = vmatprep.subr.mxu0 0.0
    %509 = vmatpush1.msra.mxu0 0.0
    %510 = vmatprep.subr.mxu0 0.0
    %511 = vmatpush1.msra.mxu0 0.0
    %512 = vmatprep.subr.mxu0 0.0
    %513 = vmatpush1.msra.mxu0 0.0
    %514 = vmatprep.subr.mxu0 0.0
    %515 = vmatpush1.msra.mxu0 0.0
    %516 = vmatprep.subr.mxu0 0.0
    %517 = vmatpush1.msra.mxu0 0.0
    %518 = vmatprep.subr.mxu0 0.0
    %519 = vmatpush1.msra.mxu0 0.0
    %520 = vmatprep.subr.mxu0 0.0
    %521 = vmatpush1.msra.mxu0 0.0
    %522 = vmatprep.subr.mxu0 0.0
    %523 = vmatpush1.msra.mxu0 0.0
    %524 = vmatprep.subr.mxu0 0.0
    %525 = vmatpush1.msra.mxu0 0.0
    %526 = vmatprep.subr.mxu0 0.0
    %527 = vmatpush1.msra.mxu0 0.0
    %528 = vmatprep.mubr.f32.mxu0 0.0
    %529 = vmatmul.mubr.f32.gmra.mrb[0].mxu0 %v462
    %v530 = vpop.f32.mrb[0].mxu0
    %v531 = vadd.f32 0.0, %v530
    %v532 = vpop.f32.mrb[0].mxu0
    %533 = vdwg.mxu0
    %s534 = scalar_lea.vmem %s4, 128
    %v535 = vld [vmem:[%s534] sm:$0xff]
    %v536 = vld [vmem:[%s534 + $0x8] sm:$0xff]
    %v537 = vld [vmem:[%s534 + $0x10] sm:$0xff]
    %v538 = vld [vmem:[%s534 + $0x18] sm:$0xff]
    %v539 = vld [vmem:[%s534 + $0x20] sm:$0xff]
    %v540 = vld [vmem:[%s534 + $0x28] sm:$0xff]
    %v541 = vld [vmem:[%s534 + $0x30] sm:$0xff]
    %v542 = vld [vmem:[%s534 + $0x38] sm:$0xff]
    %v544 = vsel %vm312, %v531, 0
    %546 = vmatprep.subr.mxu0 0.0
    %547 = vmatpush1.msra.mxu0 %v535
    %548 = vmatprep.subr.mxu0 0.0
    %549 = vmatpush1.msra.mxu0 %v536
    %550 = vmatprep.subr.mxu0 0.0
    %551 = vmatpush1.msra.mxu0 %v537
    %552 = vmatprep.subr.mxu0 0.0
    %553 = vmatpush1.msra.mxu0 %v538
    %554 = vmatprep.subr.mxu0 0.0
    %555 = vmatpush1.msra.mxu0 %v539
    %556 = vmatprep.subr.mxu0 0.0
    %557 = vmatpush1.msra.mxu0 %v540
    %558 = vmatprep.subr.mxu0 0.0
    %559 = vmatpush1.msra.mxu0 %v541
    %560 = vmatprep.subr.mxu0 0.0
    %561 = vmatpush1.msra.mxu0 %v542
    %562 = vmatprep.subr.mxu0 0.0
    %563 = vmatpush1.msra.mxu0 0.0
    %564 = vmatprep.subr.mxu0 0.0
    %565 = vmatpush1.msra.mxu0 0.0
    %566 = vmatprep.subr.mxu0 0.0
    %567 = vmatpush1.msra.mxu0 0.0
    %568 = vmatprep.subr.mxu0 0.0
    %569 = vmatpush1.msra.mxu0 0.0
    %570 = vmatprep.subr.mxu0 0.0
    %571 = vmatpush1.msra.mxu0 0.0
    %572 = vmatprep.subr.mxu0 0.0
    %573 = vmatpush1.msra.mxu0 0.0
    %574 = vmatprep.subr.mxu0 0.0
    %575 = vmatpush1.msra.mxu0 0.0
    %576 = vmatprep.subr.mxu0 0.0
    %577 = vmatpush1.msra.mxu0 0.0
    %578 = vmatprep.subr.mxu0 0.0
    %579 = vmatpush1.msra.mxu0 0.0
    %580 = vmatprep.subr.mxu0 0.0
    %581 = vmatpush1.msra.mxu0 0.0
    %582 = vmatprep.subr.mxu0 0.0
    %583 = vmatpush1.msra.mxu0 0.0
    %584 = vmatprep.subr.mxu0 0.0
    %585 = vmatpush1.msra.mxu0 0.0
    %586 = vmatprep.subr.mxu0 0.0
    %587 = vmatpush1.msra.mxu0 0.0
    %588 = vmatprep.subr.mxu0 0.0
    %589 = vmatpush1.msra.mxu0 0.0
    %590 = vmatprep.subr.mxu0 0.0
    %591 = vmatpush1.msra.mxu0 0.0
    %592 = vmatprep.subr.mxu0 0.0
    %593 = vmatpush1.msra.mxu0 0.0
    %594 = vmatprep.subr.mxu0 0.0
    %595 = vmatpush1.msra.mxu0 0.0
    %596 = vmatprep.subr.mxu0 0.0
    %597 = vmatpush1.msra.mxu0 0.0
    %598 = vmatprep.subr.mxu0 0.0
    %599 = vmatpush1.msra.mxu0 0.0
    %600 = vmatprep.subr.mxu0 0.0
    %601 = vmatpush1.msra.mxu0 0.0
    %602 = vmatprep.subr.mxu0 0.0
    %603 = vmatpush1.msra.mxu0 0.0
    %604 = vmatprep.subr.mxu0 0.0
    %605 = vmatpush1.msra.mxu0 0.0
    %606 = vmatprep.subr.mxu0 0.0
    %607 = vmatpush1.msra.mxu0 0.0
    %608 = vmatprep.subr.mxu0 0.0
    %609 = vmatpush1.msra.mxu0 0.0
    %610 = vmatprep.mubr.f32.mxu0 0.0
    %611 = vmatmul.mubr.f32.gmra.mrb[0].mxu0 %v544
    %v612 = vpop.f32.mrb[0].mxu0
    %v613 = vadd.f32 0.0, %v612
    %v614 = vpop.f32.mrb[0].mxu0
    %615 = vdwg.mxu0
    %v616 = vadd.f32 %v456, %v613
    %s617 = scalar_lea.vmem %s3, 24
    %v618 = vld [vmem:[%s617] sm:$0xff]
    %v620 = vsel %vm146, %v618, 0
    %622 = vmatprep.subr.mxu0 0.0
    %623 = vmatpush1.msra.mxu0 %v142
    %624 = vmatprep.subr.mxu0 0.0
    %625 = vmatpush1.msra.mxu0 %v144
    %626 = vmatprep.subr.mxu0 0.0
    %627 = vmatpush1.msra.mxu0 0.0
    %628 = vmatprep.subr.mxu0 0.0
    %629 = vmatpush1.msra.mxu0 0.0
    %630 = vmatprep.subr.mxu0 0.0
    %631 = vmatpush1.msra.mxu0 0.0
    %632 = vmatprep.subr.mxu0 0.0
    %633 = vmatpush1.msra.mxu0 0.0
    %634 = vmatprep.subr.mxu0 0.0
    %635 = vmatpush1.msra.mxu0 0.0
    %636 = vmatprep.subr.mxu0 0.0
    %637 = vmatpush1.msra.mxu0 0.0
    %638 = vmatprep.subr.mxu0 0.0
    %639 = vmatpush1.msra.mxu0 0.0
    %640 = vmatprep.subr.mxu0 0.0
    %641 = vmatpush1.msra.mxu0 0.0
    %642 = vmatprep.subr.mxu0 0.0
    %643 = vmatpush1.msra.mxu0 0.0
    %644 = vmatprep.subr.mxu0 0.0
    %645 = vmatpush1.msra.mxu0 0.0
    %646 = vmatprep.subr.mxu0 0.0
    %647 = vmatpush1.msra.mxu0 0.0
    %648 = vmatprep.subr.mxu0 0.0
    %649 = vmatpush1.msra.mxu0 0.0
    %650 = vmatprep.subr.mxu0 0.0
    %651 = vmatpush1.msra.mxu0 0.0
    %652 = vmatprep.subr.mxu0 0.0
    %653 = vmatpush1.msra.mxu0 0.0
    %654 = vmatprep.subr.mxu0 0.0
    %655 = vmatpush1.msra.mxu0 0.0
    %656 = vmatprep.subr.mxu0 0.0
    %657 = vmatpush1.msra.mxu0 0.0
    %658 = vmatprep.subr.mxu0 0.0
    %659 = vmatpush1.msra.mxu0 0.0
    %660 = vmatprep.subr.mxu0 0.0
    %661 = vmatpush1.msra.mxu0 0.0
    %662 = vmatprep.subr.mxu0 0.0
    %663 = vmatpush1.msra.mxu0 0.0
    %664 = vmatprep.subr.mxu0 0.0
    %665 = vmatpush1.msra.mxu0 0.0
    %666 = vmatprep.subr.mxu0 0.0
    %667 = vmatpush1.msra.mxu0 0.0
    %668 = vmatprep.subr.mxu0 0.0
    %669 = vmatpush1.msra.mxu0 0.0
    %670 = vmatprep.subr.mxu0 0.0
    %671 = vmatpush1.msra.mxu0 0.0
    %672 = vmatprep.subr.mxu0 0.0
    %673 = vmatpush1.msra.mxu0 0.0
    %674 = vmatprep.subr.mxu0 0.0
    %675 = vmatpush1.msra.mxu0 0.0
    %676 = vmatprep.subr.mxu0 0.0
    %677 = vmatpush1.msra.mxu0 0.0
    %678 = vmatprep.subr.mxu0 0.0
    %679 = vmatpush1.msra.mxu0 0.0
    %680 = vmatprep.subr.mxu0 0.0
    %681 = vmatpush1.msra.mxu0 0.0
    %682 = vmatprep.subr.mxu0 0.0
    %683 = vmatpush1.msra.mxu0 0.0
    %684 = vmatprep.subr.mxu0 0.0
    %685 = vmatpush1.msra.mxu0 0.0
    %686 = vmatprep.mubr.f32.mxu0 0.0
    %687 = vmatmul.mubr.f32.gmra.mrb[0].mxu0 %v620
    %v688 = vpop.f32.mrb[0].mxu0
    %v689 = vadd.f32 0.0, %v688
    %v690 = vpop.f32.mrb[0].mxu0
    %691 = vdwg.mxu0
    %s692 = scalar_lea.vmem %s4, 192
    %v693 = vld [vmem:[%s692] sm:$0xff]
    %v694 = vld [vmem:[%s692 + $0x8] sm:$0xff]
    %v695 = vld [vmem:[%s692 + $0x10] sm:$0xff]
    %v696 = vld [vmem:[%s692 + $0x18] sm:$0xff]
    %v697 = vld [vmem:[%s692 + $0x20] sm:$0xff]
    %v698 = vld [vmem:[%s692 + $0x28] sm:$0xff]
    %v699 = vld [vmem:[%s692 + $0x30] sm:$0xff]
    %v700 = vld [vmem:[%s692 + $0x38] sm:$0xff]
    %v702 = vsel %vm312, %v689, 0
    %704 = vmatprep.subr.mxu0 0.0
    %705 = vmatpush1.msra.mxu0 %v693
    %706 = vmatprep.subr.mxu0 0.0
    %707 = vmatpush1.msra.mxu0 %v694
    %708 = vmatprep.subr.mxu0 0.0
    %709 = vmatpush1.msra.mxu0 %v695
    %710 = vmatprep.subr.mxu0 0.0
    %711 = vmatpush1.msra.mxu0 %v696
    %712 = vmatprep.subr.mxu0 0.0
    %713 = vmatpush1.msra.mxu0 %v697
    %714 = vmatprep.subr.mxu0 0.0
    %715 = vmatpush1.msra.mxu0 %v698
    %716 = vmatprep.subr.mxu0 0.0
    %717 = vmatpush1.msra.mxu0 %v699
    %718 = vmatprep.subr.mxu0 0.0
    %719 = vmatpush1.msra.mxu0 %v700
    %720 = vmatprep.subr.mxu0 0.0
    %721 = vmatpush1.msra.mxu0 0.0
    %722 = vmatprep.subr.mxu0 0.0
    %723 = vmatpush1.msra.mxu0 0.0
    %724 = vmatprep.subr.mxu0 0.0
    %725 = vmatpush1.msra.mxu0 0.0
    %726 = vmatprep.subr.mxu0 0.0
    %727 = vmatpush1.msra.mxu0 0.0
    %728 = vmatprep.subr.mxu0 0.0
    %729 = vmatpush1.msra.mxu0 0.0
    %730 = vmatprep.subr.mxu0 0.0
    %731 = vmatpush1.msra.mxu0 0.0
    %732 = vmatprep.subr.mxu0 0.0
    %733 = vmatpush1.msra.mxu0 0.0
    %734 = vmatprep.subr.mxu0 0.0
    %735 = vmatpush1.msra.mxu0 0.0
    %736 = vmatprep.subr.mxu0 0.0
    %737 = vmatpush1.msra.mxu0 0.0
    %738 = vmatprep.subr.mxu0 0.0
    %739 = vmatpush1.msra.mxu0 0.0
    %740 = vmatprep.subr.mxu0 0.0
    %741 = vmatpush1.msra.mxu0 0.0
    %742 = vmatprep.subr.mxu0 0.0
    %743 = vmatpush1.msra.mxu0 0.0
    %744 = vmatprep.subr.mxu0 0.0
    %745 = vmatpush1.msra.mxu0 0.0
    %746 = vmatprep.subr.mxu0 0.0
    %747 = vmatpush1.msra.mxu0 0.0
    %748 = vmatprep.subr.mxu0 0.0
    %749 = vmatpush1.msra.mxu0 0.0
    %750 = vmatprep.subr.mxu0 0.0
    %751 = vmatpush1.msra.mxu0 0.0
    %752 = vmatprep.subr.mxu0 0.0
    %753 = vmatpush1.msra.mxu0 0.0
    %754 = vmatprep.subr.mxu0 0.0
    %755 = vmatpush1.msra.mxu0 0.0
    %756 = vmatprep.subr.mxu0 0.0
    %757 = vmatpush1.msra.mxu0 0.0
    %758 = vmatprep.subr.mxu0 0.0
    %759 = vmatpush1.msra.mxu0 0.0
    %760 = vmatprep.subr.mxu0 0.0
    %761 = vmatpush1.msra.mxu0 0.0
    %762 = vmatprep.subr.mxu0 0.0
    %763 = vmatpush1.msra.mxu0 0.0
    %764 = vmatprep.subr.mxu0 0.0
    %765 = vmatpush1.msra.mxu0 0.0
    %766 = vmatprep.subr.mxu0 0.0
    %767 = vmatpush1.msra.mxu0 0.0
    %768 = vmatprep.mubr.f32.mxu0 0.0
    %769 = vmatmul.mubr.f32.gmra.mrb[0].mxu0 %v702
    %v770 = vpop.f32.mrb[0].mxu0
    %v771 = vadd.f32 0.0, %v770
    %v772 = vpop.f32.mrb[0].mxu0
    %773 = vdwg.mxu0
    %v774 = vadd.f32 %v616, %v771
    %v775 = vld [vmem:[%s5] sm:$0x1]
    %v777 = vlaneseq
    %v778 = vshrl.u32 %v777, 7
    %v779 = vsub.s32 0, %v778
    %v780 = vrot.slane %v775, %v779
    %v782 = vadd.f32 %v774, %v780
    %v783 = vxor.u32 %v782, 2147483648
    %v784 = vmul.f32 %v783, 1.442695
    %v785 = vpow.pop %v784
    %v786 = vadd.f32 %v785, 1.0
    %v787 = vrcp.pop %v786
    %v788 = vmul.f32 1.0, %v787
    %v789 = vld [vmem:[%s6] sm:$0x3]
    %vm790 = vcmask 64512
    %v792 = vsel %vm790, %v789, 0
    %794 = vmatprep.subr.mxu0 0.0
    %795 = vmatpush1.msra.mxu0 %v788
    %796 = vmatprep.subr.mxu0 0.0
    %797 = vmatpush1.msra.mxu0 0.0
    %798 = vmatprep.subr.mxu0 0.0
    %799 = vmatpush1.msra.mxu0 0.0
    %800 = vmatprep.subr.mxu0 0.0
    %801 = vmatpush1.msra.mxu0 0.0
    %802 = vmatprep.subr.mxu0 0.0
    %803 = vmatpush1.msra.mxu0 0.0
    %804 = vmatprep.subr.mxu0 0.0
    %805 = vmatpush1.msra.mxu0 0.0
    %806 = vmatprep.subr.mxu0 0.0
    %807 = vmatpush1.msra.mxu0 0.0
    %808 = vmatprep.subr.mxu0 0.0
    %809 = vmatpush1.msra.mxu0 0.0
    %810 = vmatprep.subr.mxu0 0.0
    %811 = vmatpush1.msra.mxu0 0.0
    %812 = vmatprep.subr.mxu0 0.0
    %813 = vmatpush1.msra.mxu0 0.0
    %814 = vmatprep.subr.mxu0 0.0
    %815 = vmatpush1.msra.mxu0 0.0
    %816 = vmatprep.subr.mxu0 0.0
    %817 = vmatpush1.msra.mxu0 0.0
    %818 = vmatprep.subr.mxu0 0.0
    %819 = vmatpush1.msra.mxu0 0.0
    %820 = vmatprep.subr.mxu0 0.0
    %821 = vmatpush1.msra.mxu0 0.0
    %822 = vmatprep.subr.mxu0 0.0
    %823 = vmatpush1.msra.mxu0 0.0
    %824 = vmatprep.subr.mxu0 0.0
    %825 = vmatpush1.msra.mxu0 0.0
    %826 = vmatprep.subr.mxu0 0.0
    %827 = vmatpush1.msra.mxu0 0.0
    %828 = vmatprep.subr.mxu0 0.0
    %829 = vmatpush1.msra.mxu0 0.0
    %830 = vmatprep.subr.mxu0 0.0
    %831 = vmatpush1.msra.mxu0 0.0
    %832 = vmatprep.subr.mxu0 0.0
    %833 = vmatpush1.msra.mxu0 0.0
    %834 = vmatprep.subr.mxu0 0.0
    %835 = vmatpush1.msra.mxu0 0.0
    %836 = vmatprep.subr.mxu0 0.0
    %837 = vmatpush1.msra.mxu0 0.0
    %838 = vmatprep.subr.mxu0 0.0
    %839 = vmatpush1.msra.mxu0 0.0
    %840 = vmatprep.subr.mxu0 0.0
    %841 = vmatpush1.msra.mxu0 0.0
    %842 = vmatprep.subr.mxu0 0.0
    %843 = vmatpush1.msra.mxu0 0.0
    %844 = vmatprep.subr.mxu0 0.0
    %845 = vmatpush1.msra.mxu0 0.0
    %846 = vmatprep.subr.mxu0 0.0
    %847 = vmatpush1.msra.mxu0 0.0
    %848 = vmatprep.subr.mxu0 0.0
    %849 = vmatpush1.msra.mxu0 0.0
    %850 = vmatprep.subr.mxu0 0.0
    %851 = vmatpush1.msra.mxu0 0.0
    %852 = vmatprep.subr.mxu0 0.0
    %853 = vmatpush1.msra.mxu0 0.0
    %854 = vmatprep.subr.mxu0 0.0
    %855 = vmatpush1.msra.mxu0 0.0
    %856 = vmatprep.subr.mxu0 0.0
    %857 = vmatpush1.msra.mxu0 0.0
    %858 = vmatprep.mubr.f32.mxu0 0.0
    %859 = vmatmul.mubr.f32.gmra.mrb[0].mxu0 %v792
    %v860 = vpop.f32.mrb[0].mxu0
    %v861 = vadd.f32 0.0, %v860
    %v862 = vpop.f32.mrb[0].mxu0
    %863 = vdwg.mxu0
    %v864 = vld [vmem:[%s7] sm:$0xff]
    %v865 = vld [vmem:[%s7 + $0x8] sm:$0xff]
    %v866 = vld [vmem:[%s7 + $0x10] sm:$0xff]
    %v867 = vld [vmem:[%s7 + $0x18] sm:$0xff]
    %v868 = vld [vmem:[%s7 + $0x20] sm:$0xff]
    %v869 = vld [vmem:[%s7 + $0x28] sm:$0xff]
    %v870 = vld [vmem:[%s7 + $0x30] sm:$0xff]
    %v871 = vld [vmem:[%s7 + $0x38] sm:$0xff]
    %v872 = vld [vmem:[%s8] sm:$0x1]
    %v874 = vlaneseq
    %v875 = vshrl.u32 %v874, 7
    %v876 = vsub.s32 0, %v875
    %v877 = vrot.slane %v872, %v876
    %v880 = vsel %vm312, %v861, 0
    %882 = vmatprep.subr.mxu0 0.0
    %883 = vmatpush1.msra.mxu0 %v864
    %884 = vmatprep.subr.mxu0 0.0
    %885 = vmatpush1.msra.mxu0 %v865
    %886 = vmatprep.subr.mxu0 0.0
    %887 = vmatpush1.msra.mxu0 %v866
    %888 = vmatprep.subr.mxu0 0.0
    %889 = vmatpush1.msra.mxu0 %v867
    %890 = vmatprep.subr.mxu0 0.0
    %891 = vmatpush1.msra.mxu0 %v868
    %892 = vmatprep.subr.mxu0 0.0
    %893 = vmatpush1.msra.mxu0 %v869
    %894 = vmatprep.subr.mxu0 0.0
    %895 = vmatpush1.msra.mxu0 %v870
    %896 = vmatprep.subr.mxu0 0.0
    %897 = vmatpush1.msra.mxu0 %v871
    %898 = vmatprep.subr.mxu0 0.0
    %899 = vmatpush1.msra.mxu0 0.0
    %900 = vmatprep.subr.mxu0 0.0
    %901 = vmatpush1.msra.mxu0 0.0
    %902 = vmatprep.subr.mxu0 0.0
    %903 = vmatpush1.msra.mxu0 0.0
    %904 = vmatprep.subr.mxu0 0.0
    %905 = vmatpush1.msra.mxu0 0.0
    %906 = vmatprep.subr.mxu0 0.0
    %907 = vmatpush1.msra.mxu0 0.0
    %908 = vmatprep.subr.mxu0 0.0
    %909 = vmatpush1.msra.mxu0 0.0
    %910 = vmatprep.subr.mxu0 0.0
    %911 = vmatpush1.msra.mxu0 0.0
    %912 = vmatprep.subr.mxu0 0.0
    %913 = vmatpush1.msra.mxu0 0.0
    %914 = vmatprep.subr.mxu0 0.0
    %915 = vmatpush1.msra.mxu0 0.0
    %916 = vmatprep.subr.mxu0 0.0
    %917 = vmatpush1.msra.mxu0 0.0
    %918 = vmatprep.subr.mxu0 0.0
    %919 = vmatpush1.msra.mxu0 0.0
    %920 = vmatprep.subr.mxu0 0.0
    %921 = vmatpush1.msra.mxu0 0.0
    %922 = vmatprep.subr.mxu0 0.0
    %923 = vmatpush1.msra.mxu0 0.0
    %924 = vmatprep.subr.mxu0 0.0
    %925 = vmatpush1.msra.mxu0 0.0
    %926 = vmatprep.subr.mxu0 0.0
    %927 = vmatpush1.msra.mxu0 0.0
    %928 = vmatprep.subr.mxu0 0.0
    %929 = vmatpush1.msra.mxu0 0.0
    %930 = vmatprep.subr.mxu0 0.0
    %931 = vmatpush1.msra.mxu0 0.0
    %932 = vmatprep.subr.mxu0 0.0
    %933 = vmatpush1.msra.mxu0 0.0
    %934 = vmatprep.subr.mxu0 0.0
    %935 = vmatpush1.msra.mxu0 0.0
    %936 = vmatprep.subr.mxu0 0.0
    %937 = vmatpush1.msra.mxu0 0.0
    %938 = vmatprep.subr.mxu0 0.0
    %939 = vmatpush1.msra.mxu0 0.0
    %940 = vmatprep.subr.mxu0 0.0
    %941 = vmatpush1.msra.mxu0 0.0
    %942 = vmatprep.subr.mxu0 0.0
    %943 = vmatpush1.msra.mxu0 0.0
    %944 = vmatprep.subr.mxu0 0.0
    %945 = vmatpush1.msra.mxu0 0.0
    %946 = vmatprep.mubr.f32.mxu0 0.0
    %947 = vmatmul.mubr.f32.gmra.mrb[0].mxu0 %v880
    %v948 = vpop.f32.mrb[0].mxu0
    %v949 = vadd.f32 %v877, %v948
    %v950 = vpop.f32.mrb[0].mxu0
    %951 = vdwg.mxu0
    %vm952 = vcmask 74752
    %953 = vst.msk [vmem:[#allocation2] sm:$0x3] %vm952, %v949
    // Predicated region
    $region38: #{convnet_forward.1} parent=1 // pred_check
      _
    $region39: #{convnet_forward.1} parent=1 // pred_check_branch
      %955 = sbr.rel (0) target = $region41
    $region40: #{convnet_forward.1} parent=1 // pred_region
      %s957 = ssub.s32 32, 32
      %958 = vsyncadd [#allocation3], %s957
      %s960 = sshll.u32 [#allocation2], 4
      %s961 = int_to_ptr.vmem [resolvable:$true] %s960
      %963 = dma.vmem_to_hbm [thread:$0]  %s961, 32, %s9, [#allocation3]
    $region41: #{convnet_forward.1} parent=1 // pred_fallthru
      _
    // Predicated region
    $region42: #{convnet_forward.1} parent=1 // pred_check
      _
    $region43: #{convnet_forward.1} parent=1 // pred_check_branch
      %965 = sbr.rel (0) target = $region45
    $region44: #{convnet_forward.1} parent=1 // pred_region
      %966 = dma.done [#allocation3], 32
    $region45: #{convnet_forward.1} parent=1 // pred_fallthru
      _
    %967 = vsyncpa [#allocation3], 1

</llo_original>
